<compile_context>
chip_gen: v5e
topology: v5e:2x2
jax: 0.10.0
libtpu: 0.0.40
codegen_flags: <defaults>
</compile_context>

<pallas_src>
import jax
import jax.numpy as jnp
from jax.experimental import pallas as pl
from jax.experimental.pallas import tpu as pltpu


def ffm_kernel(fsp_ref, fcp_ref, wsp_ref, wcp_ref, bias_ref, wc1t_ref, wc2_ref,
               out_ref):
    # fsp_ref : (B_blk, Csp, HW)   spatial-path features for this batch block
    # fcp_ref : (B_blk, Ccp, HW)   context-path features for this batch block
    # wsp_ref : (Cout, Csp)        1x1 conv weight (BN scale folded), fsp part
    # wcp_ref : (Cout, Ccp)        1x1 conv weight (BN scale folded), fcp part
    # bias_ref: (Cout, 1)          folded BN bias (float32)
    # wc1t_ref: (Cout, Cmid)       attention conv1 weight, transposed
    # wc2_ref : (Cout, Cmid)       attention conv2 weight
    # out_ref : (B_blk, Cout, HW)
    wsp = wsp_ref[...]           # hoisted once per grid step
    wcp = wcp_ref[...]
    bias = bias_ref[...]
    wc1t = wc1t_ref[...]
    wc2 = wc2_ref[...]

    # Static unroll over the samples of this block: one grid step amortizes the
    # per-step pipeline overhead over B_blk samples.
    for b in range(fsp_ref.shape[0]):
        # convblk 1x1 conv (BN scale pre-folded into wsp/wcp), f32 accumulation
        # on the MXU even when operands are bf16.
        feat = jnp.dot(wsp, fsp_ref[b], preferred_element_type=jnp.float32)
        feat = feat + jnp.dot(wcp, fcp_ref[b], preferred_element_type=jnp.float32)
        feat = jnp.maximum(feat + bias, 0.0)                 # BN bias + ReLU (f32, VPU)

        # AdaptiveAvgPool2d(1): mean over all spatial positions -> (Cout, 1)
        pooled = jnp.mean(feat, axis=1, keepdims=True)

        # attention branch: conv1 -> ReLU -> conv2 -> sigmoid.
        # Width-1 RHS: keep it off the MXU, do broadcast-multiply + reduce on VPU/XLU.
        a1 = jnp.sum(wc1t * pooled, axis=0, keepdims=True)   # (1, Cmid)
        a1 = jnp.maximum(a1, 0.0)
        a2 = jnp.sum(wc2 * a1, axis=1, keepdims=True)        # (Cout, 1)
        scale = 1.0 + jax.nn.sigmoid(a2)                     # feat*atten + feat == feat*(1+atten)

        # one explicit lane-broadcast of the per-channel scale, then one multiply
        out_ref[b] = (feat * jnp.broadcast_to(scale, feat.shape)).astype(out_ref.dtype)


def _choose_batch_block(n, cin, cout, hw, itemsize):
    """Biggest batch block that (a) keeps >= 2 grid steps when N >= 2 (two v7x
    TensorCores), (b) divides N, (c) stays well under the scoped VMEM limit."""
    if n <= 1:
        return 1
    per_sample_bytes = (cin + cout) * hw * itemsize          # inputs + output per sample
    cap = max(1, (4 << 20) // max(per_sample_bytes, 1))      # ~4 MiB/block; x2 buffers << 32 MiB
    blk = max(1, min(n // 2, cap))
    while n % blk:
        blk -= 1
    return blk


def feature_fusion_module(fsp, fcp, w1, bn_gamma, bn_beta, bn_mean, bn_var,
                          wc1, wc2, eps=1e-5, batch_block=None, out_dtype=None):
    """fsp, fcp: NCHW (float32 or bfloat16). Returns NCHW of shape (N, Cout, H, W)."""
    N, c1, H, W = fsp.shape
    c2 = fcp.shape[1]
    Cin = c1 + c2
    Cout = w1.shape[0]
    Cmid = wc1.shape[0]
    HW = H * W
    in_dtype = fsp.dtype
    if out_dtype is None:
        out_dtype = in_dtype

    # Flatten spatial only — NO channel concatenation in HBM; the conv weight is
    # split per input instead.
    fsp3 = fsp.reshape(N, c1, HW)
    fcp3 = fcp.reshape(N, c2, HW).astype(in_dtype)

    # Fold BN scale into the 1x1 conv weight (per output channel); keep only bias.
    scale = bn_gamma.astype(jnp.float32) / jnp.sqrt(bn_var.astype(jnp.float32) + eps)
    bias = (bn_beta.astype(jnp.float32) - bn_mean.astype(jnp.float32) * scale)
    bias = bias.reshape(Cout, 1)
    w1_folded = w1.reshape(Cout, Cin).astype(jnp.float32) * scale[:, None]
    w_sp = w1_folded[:, :c1].astype(in_dtype)                # (Cout, c1)
    w_cp = w1_folded[:, c1:].astype(in_dtype)                # (Cout, c2)
    # Attention weights stay f32 (tiny, VPU path; v5e has no bf16 VPU/EUP).
    wc1_t = wc1.reshape(Cmid, Cout).T.astype(jnp.float32)    # (Cout, Cmid)
    wc2_2d = wc2.reshape(Cout, Cmid).astype(jnp.float32)     # (Cout, Cmid)

    if batch_block is None:
        batch_block = _choose_batch_block(
            N, Cin, Cout, HW, jnp.dtype(in_dtype).itemsize)
    nb = N // batch_block

    in_bytes = int((fsp3.size + fcp3.size) * jnp.dtype(in_dtype).itemsize)
    out_bytes = int(N * Cout * HW * jnp.dtype(out_dtype).itemsize)
    w_bytes = int((w_sp.size + w_cp.size) * jnp.dtype(in_dtype).itemsize
                  + (bias.size + wc1_t.size + wc2_2d.size) * 4)
    cost = pl.CostEstimate(
        flops=int(2 * N * Cout * Cin * HW + 4 * N * Cout * Cmid + 2 * N * Cout * HW),
        transcendentals=int(N * Cout),
        bytes_accessed=in_bytes + out_bytes + w_bytes,
    )

    out = pl.pallas_call(
        ffm_kernel,
        out_shape=jax.ShapeDtypeStruct((N, Cout, HW), out_dtype),
        grid=(nb,),
        in_specs=[
            pl.BlockSpec((batch_block, c1, HW), lambda i: (i, 0, 0)),
            pl.BlockSpec((batch_block, c2, HW), lambda i: (i, 0, 0)),
            pl.BlockSpec((Cout, c1), lambda i: (0, 0)),
            pl.BlockSpec((Cout, c2), lambda i: (0, 0)),
            pl.BlockSpec((Cout, 1), lambda i: (0, 0)),
            pl.BlockSpec((Cout, Cmid), lambda i: (0, 0)),
            pl.BlockSpec((Cout, Cmid), lambda i: (0, 0)),
        ],
        out_specs=pl.BlockSpec((batch_block, Cout, HW), lambda i: (i, 0, 0)),
        compiler_params=pltpu.CompilerParams(dimension_semantics=("parallel",)),
        cost_estimate=cost,
    )(fsp3, fcp3, w_sp, w_cp, bias, wc1_t, wc2_2d)

    # NOTE: at real BiSeNet sizes (Cout >= 256, HW in the thousands) tile HW in
    # lane-dense chunks and raise vmem_limit_bytes so double-buffered blocks fit
    # v7x's 64 MiB VMEM; unnecessary at these shapes.
    return out.reshape(N, Cout, H, W)


def feature_fusion_reference(fsp, fcp, w1, bn_gamma, bn_beta, bn_mean, bn_var,
                             wc1, wc2, eps=1e-5):
    """Pure-JAX reference (inference-mode BN) for correctness checking."""
    fcat = jnp.concatenate([fsp, fcp], axis=1)                       # (N, Cin, H, W)
    N, Cin, H, W = fcat.shape
    Cout = w1.shape[0]
    Cmid = wc1.shape[0]
    x = fcat.reshape(N, Cin, H * W)
    feat = jnp.einsum('oc,ncs->nos', w1.reshape(Cout, Cin), x)
    scale = bn_gamma / jnp.sqrt(bn_var + eps)
    bias = bn_beta - bn_mean * scale
    feat = feat * scale[None, :, None] + bias[None, :, None]
    feat = jnp.maximum(feat, 0.0)
    pooled = jnp.mean(feat, axis=2)                                  # (N, Cout)
    a = jnp.maximum(pooled @ wc1.reshape(Cmid, Cout).T, 0.0)
    a = jax.nn.sigmoid(a @ wc2.reshape(Cout, Cmid).T)                # (N, Cout)
    out = feat * a[:, :, None] + feat
    return out.reshape(N, Cout, H, W)


if __name__ == "__main__":
    key = jax.random.PRNGKey(0)
    # Small shapes: fsp (2,4,16,16), fcp (2,4,16,16) -> in_channels=8, out_channels=8
    N, Csp, Ccp, H, W = 2, 4, 4, 16, 16
    Cin = Csp + Ccp
    Cout = 8
    Cmid = max(Cout // 4, 1)

    keys = jax.random.split(key, 9)
    fsp = jax.random.normal(keys[0], (N, Csp, H, W), jnp.float32)
    fcp = jax.random.normal(keys[1], (N, Ccp, H, W), jnp.float32)

    # deterministic synthetic parameters (matching nn.Module shapes)
    w1 = jax.random.normal(keys[2], (Cout, Cin, 1, 1), jnp.float32) * 0.1    # convblk.conv
    bn_gamma = 1.0 + 0.1 * jax.random.normal(keys[3], (Cout,), jnp.float32)  # convblk.bn.weight
    bn_beta = 0.1 * jax.random.normal(keys[4], (Cout,), jnp.float32)         # convblk.bn.bias
    bn_mean = 0.05 * jax.random.normal(keys[5], (Cout,), jnp.float32)        # running_mean
    bn_var = jnp.abs(jax.random.normal(keys[6], (Cout,), jnp.float32)) + 0.5 # running_var
    wc1 = jax.random.normal(keys[7], (Cmid, Cout, 1, 1), jnp.float32) * 0.1  # conv1
    wc2 = jax.random.normal(keys[8], (Cout, Cmid, 1, 1), jnp.float32) * 0.1  # conv2

    ref = feature_fusion_reference(fsp, fcp, w1, bn_gamma, bn_beta, bn_mean, bn_var, wc1, wc2)

    # float32 path: must match the reference tightly.
    out = feature_fusion_module(fsp, fcp, w1, bn_gamma, bn_beta, bn_mean, bn_var, wc1, wc2)
    out = jax.block_until_ready(out)
    assert out.shape == (N, Cout, H, W), out.shape
    assert jnp.allclose(out, ref, atol=1e-4, rtol=1e-4), float(jnp.max(jnp.abs(out - ref)))

    # bfloat16 I/O path (v6e/v7x HBM-traffic halving; accumulation & elementwise stay f32).
    out_bf16 = feature_fusion_module(fsp.astype(jnp.bfloat16), fcp.astype(jnp.bfloat16),
                                     w1, bn_gamma, bn_beta, bn_mean, bn_var, wc1, wc2)
    out_bf16 = jax.block_until_ready(out_bf16).astype(jnp.float32)
    assert out_bf16.shape == (N, Cout, H, W), out_bf16.shape
    assert jnp.allclose(out_bf16, ref, atol=1e-1, rtol=1e-1), \
        float(jnp.max(jnp.abs(out_bf16 - ref)))

    print("KERNEL_OK")
</pallas_src>

<mosaic_0001>
module attributes {stable_mosaic.version = 11 : i64} {
  func.func @ffm_kernel(%arg0: i32, %arg1: memref<1x4x256xf32, #tpu.memory_space<vmem>>, %arg2: memref<1x4x256xf32, #tpu.memory_space<vmem>>, %arg3: memref<8x4xf32, #tpu.memory_space<vmem>>, %arg4: memref<8x4xf32, #tpu.memory_space<vmem>>, %arg5: memref<8x1xf32, #tpu.memory_space<vmem>>, %arg6: memref<8x2xf32, #tpu.memory_space<vmem>>, %arg7: memref<8x2xf32, #tpu.memory_space<vmem>>, %arg8: memref<1x8x256xf32, #tpu.memory_space<vmem>>) attributes {dimension_semantics = [#tpu.dimension_semantics<parallel>], iteration_bounds = array<i64: 2>, scalar_prefetch = 0 : i64, scratch_operands = 0 : i64, tpu.core_type = #tpu.core_type<tc>, window_params = [{transform_indices = @transform_0, window_bounds = array<i64: 1, 4, 256>}, {transform_indices = @transform_1, window_bounds = array<i64: 1, 4, 256>}, {pipeline_mode = #tpu.pipeline_mode<synchronous>, transform_indices = @transform_2, window_bounds = array<i64: 8, 4>}, {pipeline_mode = #tpu.pipeline_mode<synchronous>, transform_indices = @transform_3, window_bounds = array<i64: 8, 4>}, {pipeline_mode = #tpu.pipeline_mode<synchronous>, transform_indices = @transform_4, window_bounds = array<i64: 8, 1>}, {pipeline_mode = #tpu.pipeline_mode<synchronous>, transform_indices = @transform_5, window_bounds = array<i64: 8, 2>}, {pipeline_mode = #tpu.pipeline_mode<synchronous>, transform_indices = @transform_6, window_bounds = array<i64: 8, 2>}, {transform_indices = @transform_7, window_bounds = array<i64: 1, 8, 256>}]} {
    %c0 = arith.constant 0 : index
    %c0_0 = arith.constant 0 : index
    %0 = vector.load %arg3[%c0, %c0_0] : memref<8x4xf32, #tpu.memory_space<vmem>>, vector<8x4xf32>
    %c0_1 = arith.constant 0 : index
    %c0_2 = arith.constant 0 : index
    %1 = vector.load %arg4[%c0_1, %c0_2] : memref<8x4xf32, #tpu.memory_space<vmem>>, vector<8x4xf32>
    %c0_3 = arith.constant 0 : index
    %c0_4 = arith.constant 0 : index
    %2 = vector.load %arg5[%c0_3, %c0_4] : memref<8x1xf32, #tpu.memory_space<vmem>>, vector<8x1xf32>
    %c0_5 = arith.constant 0 : index
    %c0_6 = arith.constant 0 : index
    %3 = vector.load %arg6[%c0_5, %c0_6] : memref<8x2xf32, #tpu.memory_space<vmem>>, vector<8x2xf32>
    %c0_7 = arith.constant 0 : index
    %c0_8 = arith.constant 0 : index
    %4 = vector.load %arg7[%c0_7, %c0_8] : memref<8x2xf32, #tpu.memory_space<vmem>>, vector<8x2xf32>
    %c0_9 = arith.constant 0 : index
    %c0_10 = arith.constant 0 : index
    %c0_11 = arith.constant 0 : index
    %5 = vector.load %arg1[%c0_9, %c0_10, %c0_11] : memref<1x4x256xf32, #tpu.memory_space<vmem>>, vector<1x4x256xf32>
    %6 = vector.shape_cast %5 : vector<1x4x256xf32> to vector<4x256xf32>
    %cst = arith.constant dense<0.000000e+00> : vector<8x256xf32>
    %7 = tpu.matmul %0, %6, %cst {dimension_numbers = #tpu.dot_dimension_numbers<[1], [0], [0], [1], [0, 0, 1, 1], [], []>} : vector<8x4xf32>, vector<4x256xf32>, vector<8x256xf32> -> vector<8x256xf32>
    %c0_12 = arith.constant 0 : index
    %c0_13 = arith.constant 0 : index
    %c0_14 = arith.constant 0 : index
    %8 = vector.load %arg2[%c0_12, %c0_13, %c0_14] : memref<1x4x256xf32, #tpu.memory_space<vmem>>, vector<1x4x256xf32>
    %9 = vector.shape_cast %8 : vector<1x4x256xf32> to vector<4x256xf32>
    %cst_15 = arith.constant dense<0.000000e+00> : vector<8x256xf32>
    %10 = tpu.matmul %1, %9, %cst_15 {dimension_numbers = #tpu.dot_dimension_numbers<[1], [0], [0], [1], [0, 0, 1, 1], [], []>} : vector<8x4xf32>, vector<4x256xf32>, vector<8x256xf32> -> vector<8x256xf32>
    %11 = arith.addf %7, %10 : vector<8x256xf32>
    %12 = vector.broadcast %2 : vector<8x1xf32> to vector<8x256xf32>
    %13 = arith.addf %11, %12 : vector<8x256xf32>
    %cst_16 = arith.constant 0.000000e+00 : f32
    %14 = vector.broadcast %cst_16 : f32 to vector<8x256xf32>
    %15 = arith.maximumf %13, %14 : vector<8x256xf32>
    %cst_17 = arith.constant dense<0.000000e+00> : vector<8xf32>
    %16 = vector.multi_reduction <add>, %15, %cst_17 [1] : vector<8x256xf32> to vector<8xf32>
    %17 = vector.shape_cast %16 : vector<8xf32> to vector<8x1xf32>
    %cst_18 = arith.constant 2.560000e+02 : f32
    %18 = vector.broadcast %cst_18 : f32 to vector<8x1xf32>
    %19 = arith.divf %17, %18 : vector<8x1xf32>
    %20 = vector.broadcast %19 : vector<8x1xf32> to vector<8x2xf32>
    %21 = arith.mulf %3, %20 : vector<8x2xf32>
    %cst_19 = arith.constant dense<0.000000e+00> : vector<2xf32>
    %22 = vector.multi_reduction <add>, %21, %cst_19 [0] : vector<8x2xf32> to vector<2xf32>
    %23 = vector.shape_cast %22 : vector<2xf32> to vector<1x2xf32>
    %cst_20 = arith.constant 0.000000e+00 : f32
    %24 = vector.broadcast %cst_20 : f32 to vector<1x2xf32>
    %25 = arith.maximumf %23, %24 : vector<1x2xf32>
    %26 = vector.broadcast %25 : vector<1x2xf32> to vector<8x2xf32>
    %27 = arith.mulf %4, %26 : vector<8x2xf32>
    %cst_21 = arith.constant dense<0.000000e+00> : vector<8xf32>
    %28 = vector.multi_reduction <add>, %27, %cst_21 [1] : vector<8x2xf32> to vector<8xf32>
    %29 = vector.shape_cast %28 : vector<8xf32> to vector<8x1xf32>
    %30 = arith.negf %29 : vector<8x1xf32>
    %31 = math.exp %30 : vector<8x1xf32>
    %cst_22 = arith.constant 1.000000e+00 : f32
    %32 = vector.broadcast %cst_22 : f32 to vector<8x1xf32>
    %33 = arith.addf %32, %31 : vector<8x1xf32>
    %34 = arith.divf %32, %33 : vector<8x1xf32>
    %cst_23 = arith.constant 1.000000e+00 : f32
    %35 = vector.broadcast %cst_23 : f32 to vector<8x1xf32>
    %36 = arith.addf %35, %34 : vector<8x1xf32>
    %37 = vector.shape_cast %36 : vector<8x1xf32> to vector<8x1xf32>
    %38 = vector.broadcast %37 : vector<8x1xf32> to vector<8x256xf32>
    %39 = arith.mulf %15, %38 : vector<8x256xf32>
    %c0_24 = arith.constant 0 : index
    %c0_25 = arith.constant 0 : index
    %c0_26 = arith.constant 0 : index
    %40 = vector.load %arg8[%c0_24, %c0_25, %c0_26] : memref<1x8x256xf32, #tpu.memory_space<vmem>>, vector<1x8x256xf32>
    %41 = vector.shape_cast %40 : vector<1x8x256xf32> to vector<8x256xf32>
    %42 = vector.shape_cast %39 : vector<8x256xf32> to vector<1x8x256xf32>
    tpu.vector_store %arg8[%c0_24, %c0_25, %c0_26], %42 {strides = array<i32>} : memref<1x8x256xf32, #tpu.memory_space<vmem>>, vector<1x8x256xf32>,
    return
  }
  func.func @transform_0(%arg0: i32) -> (i32, i32, i32) {
    %c0_i32 = arith.constant 0 : i32
    %c0_i32_0 = arith.constant 0 : i32
    %c0_i32_1 = arith.constant 0 : i32
    return %arg0, %c0_i32, %c0_i32_0 : i32, i32, i32
  }
  func.func @transform_1(%arg0: i32) -> (i32, i32, i32) {
    %c0_i32 = arith.constant 0 : i32
    %c0_i32_0 = arith.constant 0 : i32
    %c0_i32_1 = arith.constant 0 : i32
    return %arg0, %c0_i32, %c0_i32_0 : i32, i32, i32
  }
  func.func @transform_2(%arg0: i32) -> (i32, i32) {
    %c0_i32 = arith.constant 0 : i32
    %c0_i32_0 = arith.constant 0 : i32
    %c0_i32_1 = arith.constant 0 : i32
    return %c0_i32, %c0_i32_0 : i32, i32
  }
  func.func @transform_3(%arg0: i32) -> (i32, i32) {
    %c0_i32 = arith.constant 0 : i32
    %c0_i32_0 = arith.constant 0 : i32
    %c0_i32_1 = arith.constant 0 : i32
    return %c0_i32, %c0_i32_0 : i32, i32
  }
  func.func @transform_4(%arg0: i32) -> (i32, i32) {
    %c0_i32 = arith.constant 0 : i32
    %c0_i32_0 = arith.constant 0 : i32
    %c0_i32_1 = arith.constant 0 : i32
    return %c0_i32, %c0_i32_0 : i32, i32
  }
  func.func @transform_5(%arg0: i32) -> (i32, i32) {
    %c0_i32 = arith.constant 0 : i32
    %c0_i32_0 = arith.constant 0 : i32
    %c0_i32_1 = arith.constant 0 : i32
    return %c0_i32, %c0_i32_0 : i32, i32
  }
  func.func @transform_6(%arg0: i32) -> (i32, i32) {
    %c0_i32 = arith.constant 0 : i32
    %c0_i32_0 = arith.constant 0 : i32
    %c0_i32_1 = arith.constant 0 : i32
    return %c0_i32, %c0_i32_0 : i32, i32
  }
  func.func @transform_7(%arg0: i32) -> (i32, i32, i32) {
    %c0_i32 = arith.constant 0 : i32
    %c0_i32_0 = arith.constant 0 : i32
    %c0_i32_1 = arith.constant 0 : i32
    return %arg0, %c0_i32, %c0_i32_0 : i32, i32, i32
  }
}

</mosaic_0001>

<llo_original>
// kernel: tpu_custom_call.1
$region0: #{tpu_custom_call.1}
  #allocation0 [shape = 'u32[]', space=smem, size = 0x4, offset = 0x4, fixed_abs, tag = 'smem constant byte address 0x4 - core index']
  #allocation1 [shape = 'u32[72,128]{1,0:T(1,128)}', space=vmem, size = 0x9000, scoped, tag = 'internal scratch']
  %s0 = inlined_call_operand.vmem [shape: f32[2,4,256], index: 0, kind: input, shape index: {}]
  %s1 = inlined_call_operand.vmem [shape: f32[2,4,256], index: 1, kind: input, shape index: {}]
  %s2 = inlined_call_operand.vmem [shape: f32[8,4], index: 2, kind: input, shape index: {}]
  %s3 = inlined_call_operand.vmem [shape: f32[8,4], index: 3, kind: input, shape index: {}]
  %s4 = inlined_call_operand.vmem [shape: f32[8,1], index: 4, kind: input, shape index: {}]
  %s5 = inlined_call_operand.vmem [shape: f32[8,2], index: 5, kind: input, shape index: {}]
  %s6 = inlined_call_operand.vmem [shape: f32[8,2], index: 6, kind: input, shape index: {}]
  %s7 = inlined_call_operand.hbm [shape: f32[2,8,256], index: 7, kind: output, shape index: {}]
  %s8 = sld [smem:[#allocation0]]
  $region61: #{tpu_custom_call.1} parent=0
    _
  %s10 = ssub.s32 1, %s8
  %s11 = scalar_select 0, %s10, %s8
  $region1: #{tpu_custom_call.1} parent=0
    #allocation2 [shape = 'u8[16384]{0}', space=vmem, size = 0x4000, scoped, tag = 'output window, operand 0']
    #allocation3 [shape = 's32[2]{0}', space=sflag, size = 0x8, scoped, tag = 'scoped memory for tpu_custom_call.1']
    %12 = vsyncpa [#allocation3], 0
    %s13 = scalar_lea.sflag [#allocation3], 1
    %14 = vsyncpa %s13, 0
    loop: start=0, step=1, limit=4
    $region2: #{tpu_custom_call.1} parent=1 // loop_pre_header
      _
    $region3: #{tpu_custom_call.1} parent=1 // loop_header
      %s16 = sphi 0, %s20
      %p17 = scmp.ge.s32.totalorder %s16, 4
      %s26 = sphi 0, %s28
      %s29 = sphi 0, %s26
      %s30 = sphi 0, %s29
      %s46 = sphi 0, %s30
      %s52 = sphi 0, %s54
      %s55 = sphi 0, %s52
      %s56 = sphi 0, %s55
      %s72 = sphi 0, %s56
      %s76 = sphi 0, %s76
      %s78 = sphi 0, %s76
      %s79 = sphi 0, %s78
      %s93 = sphi 0, %s79
      %s97 = sphi 0, %s97
      %s99 = sphi 0, %s97
      %s100 = sphi 0, %s99
      %s114 = sphi 0, %s100
      %s118 = sphi 0, %s118
      %s120 = sphi 0, %s118
      %s121 = sphi 0, %s120
      %s135 = sphi 0, %s121
      %s139 = sphi 0, %s139
      %s141 = sphi 0, %s139
      %s142 = sphi 0, %s141
      %s156 = sphi 0, %s142
      %s160 = sphi 0, %s160
      %s162 = sphi 0, %s160
      %s163 = sphi 0, %s162
      %s177 = sphi 0, %s163
      %s183 = sphi 0, %s185
      %s186 = sphi 0, %s183
      %s187 = sphi 0, %s186
      %s203 = sphi 0, %s187
    $region4: #{tpu_custom_call.1} parent=1 // loop_header_branch
      %19 = sbr.rel (%p17) target = $region8
    $region5: #{tpu_custom_call.1} parent=1 // loop_body
      %s21 = ssub.s32 %s16, 1
      %s22 = ssub.s32 %s16, 2
      %s23 = sadd.s32 %s16, 1
      %s24 = ssub.s32 %s16, %s23
      %p25 = scmp.eq.s32.totalorder %s24, 0
      %s27 = sadd.s32 %s26, 1
      %s28 = scalar_select %p25, %s26, %s27
      %p31 = pneg %p25
      %p32 = scmp.eq.s32.totalorder %s16, 1
      %p33 = por %p31, %p32
      %p34 = scmp.ne.s32.totalorder %s26, %s29
      %p35 = scmp.eq.s32.totalorder %s16, 0
      %p36 = por %p34, %p35
      %p37 = scmp.ne.s32.totalorder %s26, %s29
      %p38 = scmp.eq.s32.totalorder %s21, 1
      %p39 = por %p37, %p38
      %p40 = scmp.ne.s32.totalorder %s29, %s30
      %p41 = scmp.eq.s32.totalorder %s21, 0
      %p42 = por %p40, %p41
      %p43 = scmp.ne.s32.totalorder %s29, %s30
      %p44 = scmp.eq.s32.totalorder %s22, 1
      %p45 = por %p43, %p44
      %p47 = scmp.ne.s32.totalorder %s30, %s46
      %p48 = scmp.eq.s32.totalorder %s22, 0
      %p49 = por %p47, %p48
      %s50 = ssub.s32 %s16, %s23
      %p51 = scmp.eq.s32.totalorder %s50, 0
      %s53 = sadd.s32 %s52, 1
      %s54 = scalar_select %p51, %s52, %s53
      %p57 = pneg %p51
      %p58 = scmp.eq.s32.totalorder %s16, 1
      %p59 = por %p57, %p58
      %p60 = scmp.ne.s32.totalorder %s52, %s55
      %p61 = scmp.eq.s32.totalorder %s16, 0
      %p62 = por %p60, %p61
      %p63 = scmp.ne.s32.totalorder %s52, %s55
      %p64 = scmp.eq.s32.totalorder %s21, 1
      %p65 = por %p63, %p64
      %p66 = scmp.ne.s32.totalorder %s55, %s56
      %p67 = scmp.eq.s32.totalorder %s21, 0
      %p68 = por %p66, %p67
      %p69 = scmp.ne.s32.totalorder %s55, %s56
      %p70 = scmp.eq.s32.totalorder %s22, 1
      %p71 = por %p69, %p70
      %p73 = scmp.ne.s32.totalorder %s56, %s72
      %p74 = scmp.eq.s32.totalorder %s22, 0
      %p75 = por %p73, %p74
      %s77 = sadd.s32 %s76, 1
      %p80 = scmp.eq.s32.totalorder %s16, 1
      %p81 = scmp.ne.s32.totalorder %s76, %s78
      %p82 = scmp.eq.s32.totalorder %s16, 0
      %p83 = por %p81, %p82
      %p84 = scmp.ne.s32.totalorder %s76, %s78
      %p85 = scmp.eq.s32.totalorder %s21, 1
      %p86 = por %p84, %p85
      %p87 = scmp.ne.s32.totalorder %s78, %s79
      %p88 = scmp.eq.s32.totalorder %s21, 0
      %p89 = por %p87, %p88
      %p90 = scmp.ne.s32.totalorder %s78, %s79
      %p91 = scmp.eq.s32.totalorder %s22, 1
      %p92 = por %p90, %p91
      %p94 = scmp.ne.s32.totalorder %s79, %s93
      %p95 = scmp.eq.s32.totalorder %s22, 0
      %p96 = por %p94, %p95
      %s98 = sadd.s32 %s97, 1
      %p101 = scmp.eq.s32.totalorder %s16, 1
      %p102 = scmp.ne.s32.totalorder %s97, %s99
      %p103 = scmp.eq.s32.totalorder %s16, 0
      %p104 = por %p102, %p103
      %p105 = scmp.ne.s32.totalorder %s97, %s99
      %p106 = scmp.eq.s32.totalorder %s21, 1
      %p107 = por %p105, %p106
      %p108 = scmp.ne.s32.totalorder %s99, %s100
      %p109 = scmp.eq.s32.totalorder %s21, 0
      %p110 = por %p108, %p109
      %p111 = scmp.ne.s32.totalorder %s99, %s100
      %p112 = scmp.eq.s32.totalorder %s22, 1
      %p113 = por %p111, %p112
      %p115 = scmp.ne.s32.totalorder %s100, %s114
      %p116 = scmp.eq.s32.totalorder %s22, 0
      %p117 = por %p115, %p116
      %s119 = sadd.s32 %s118, 1
      %p122 = scmp.eq.s32.totalorder %s16, 1
      %p123 = scmp.ne.s32.totalorder %s118, %s120
      %p124 = scmp.eq.s32.totalorder %s16, 0
      %p125 = por %p123, %p124
      %p126 = scmp.ne.s32.totalorder %s118, %s120
      %p127 = scmp.eq.s32.totalorder %s21, 1
      %p128 = por %p126, %p127
      %p129 = scmp.ne.s32.totalorder %s120, %s121
      %p130 = scmp.eq.s32.totalorder %s21, 0
      %p131 = por %p129, %p130
      %p132 = scmp.ne.s32.totalorder %s120, %s121
      %p133 = scmp.eq.s32.totalorder %s22, 1
      %p134 = por %p132, %p133
      %p136 = scmp.ne.s32.totalorder %s121, %s135
      %p137 = scmp.eq.s32.totalorder %s22, 0
      %p138 = por %p136, %p137
      %s140 = sadd.s32 %s139, 1
      %p143 = scmp.eq.s32.totalorder %s16, 1
      %p144 = scmp.ne.s32.totalorder %s139, %s141
      %p145 = scmp.eq.s32.totalorder %s16, 0
      %p146 = por %p144, %p145
      %p147 = scmp.ne.s32.totalorder %s139, %s141
      %p148 = scmp.eq.s32.totalorder %s21, 1
      %p149 = por %p147, %p148
      %p150 = scmp.ne.s32.totalorder %s141, %s142
      %p151 = scmp.eq.s32.totalorder %s21, 0
      %p152 = por %p150, %p151
      %p153 = scmp.ne.s32.totalorder %s141, %s142
      %p154 = scmp.eq.s32.totalorder %s22, 1
      %p155 = por %p153, %p154
      %p157 = scmp.ne.s32.totalorder %s142, %s156
      %p158 = scmp.eq.s32.totalorder %s22, 0
      %p159 = por %p157, %p158
      %s161 = sadd.s32 %s160, 1
      %p164 = scmp.eq.s32.totalorder %s16, 1
      %p165 = scmp.ne.s32.totalorder %s160, %s162
      %p166 = scmp.eq.s32.totalorder %s16, 0
      %p167 = por %p165, %p166
      %p168 = scmp.ne.s32.totalorder %s160, %s162
      %p169 = scmp.eq.s32.totalorder %s21, 1
      %p170 = por %p168, %p169
      %p171 = scmp.ne.s32.totalorder %s162, %s163
      %p172 = scmp.eq.s32.totalorder %s21, 0
      %p173 = por %p171, %p172
      %p174 = scmp.ne.s32.totalorder %s162, %s163
      %p175 = scmp.eq.s32.totalorder %s22, 1
      %p176 = por %p174, %p175
      %p178 = scmp.ne.s32.totalorder %s163, %s177
      %p179 = scmp.eq.s32.totalorder %s22, 0
      %p180 = por %p178, %p179
      %s181 = ssub.s32 %s16, %s23
      %p182 = scmp.eq.s32.totalorder %s181, 0
      %s184 = sadd.s32 %s183, 1
      %s185 = scalar_select %p182, %s183, %s184
      %p188 = pneg %p182
      %p189 = scmp.eq.s32.totalorder %s16, 1
      %p190 = por %p188, %p189
      %p191 = scmp.ne.s32.totalorder %s183, %s186
      %p192 = scmp.eq.s32.totalorder %s16, 0
      %p193 = por %p191, %p192
      %p194 = scmp.ne.s32.totalorder %s183, %s186
      %p195 = scmp.eq.s32.totalorder %s21, 1
      %p196 = por %p194, %p195
      %p197 = scmp.ne.s32.totalorder %s186, %s187
      %p198 = scmp.eq.s32.totalorder %s21, 0
      %p199 = por %p197, %p198
      %p200 = scmp.ne.s32.totalorder %s186, %s187
      %p201 = scmp.eq.s32.totalorder %s22, 1
      %p202 = por %p200, %p201
      %p204 = scmp.ne.s32.totalorder %s187, %s203
      %p205 = scmp.eq.s32.totalorder %s22, 0
      %p206 = por %p204, %p205
      %p207 = scmp.le.s32.totalorder 1, %s16
      %p208 = scmp.lt.s32.totalorder %s16, 3
      %p209 = pnand %p207, %p208
      %p210 = pneg %p209
      // Predicated region
      $region9: #{tpu_custom_call.1} parent=5 // pred_check
        _
      $region10: #{tpu_custom_call.1} parent=5 // pred_check_branch
        %212 = sbr.rel (%p209) target = $region12
      $region11: #{tpu_custom_call.1} parent=5 // pred_region
        %s213 = ssub.s32 %s16, 1
        // Predicated region
        $region13: #{tpu_custom_call.1} parent=11 // pred_check
          %p214 = pneg %p89
        $region14: #{tpu_custom_call.1} parent=11 // pred_check_branch
          %216 = sbr.rel (%p214) target = $region16
        $region15: #{tpu_custom_call.1} parent=11 // pred_region
          _
        $region16: #{tpu_custom_call.1} parent=11 // pred_fallthru
          _
        // Predicated region
        $region17: #{tpu_custom_call.1} parent=11 // pred_check
          %p217 = pneg %p110
        $region18: #{tpu_custom_call.1} parent=11 // pred_check_branch
          %219 = sbr.rel (%p217) target = $region20
        $region19: #{tpu_custom_call.1} parent=11 // pred_region
          _
        $region20: #{tpu_custom_call.1} parent=11 // pred_fallthru
          _
        // Predicated region
        $region21: #{tpu_custom_call.1} parent=11 // pred_check
          %p220 = pneg %p131
        $region22: #{tpu_custom_call.1} parent=11 // pred_check_branch
          %222 = sbr.rel (%p220) target = $region24
        $region23: #{tpu_custom_call.1} parent=11 // pred_region
          _
        $region24: #{tpu_custom_call.1} parent=11 // pred_fallthru
          _
        // Predicated region
        $region25: #{tpu_custom_call.1} parent=11 // pred_check
          %p223 = pneg %p152
        $region26: #{tpu_custom_call.1} parent=11 // pred_check_branch
          %225 = sbr.rel (%p223) target = $region28
        $region27: #{tpu_custom_call.1} parent=11 // pred_region
          _
        $region28: #{tpu_custom_call.1} parent=11 // pred_fallthru
          _
        // Predicated region
        $region29: #{tpu_custom_call.1} parent=11 // pred_check
          %p226 = pneg %p173
        $region30: #{tpu_custom_call.1} parent=11 // pred_check_branch
          %228 = sbr.rel (%p226) target = $region32
        $region31: #{tpu_custom_call.1} parent=11 // pred_region
          _
        $region32: #{tpu_custom_call.1} parent=11 // pred_fallthru
          _
      $region12: #{tpu_custom_call.1} parent=5 // pred_fallthru
        _
      %p229 = scmp.lt.s32.totalorder %s16, 2
      // Predicated region
      $region33: #{tpu_custom_call.1} parent=5 // pred_check
        %p230 = pneg %p229
      $region34: #{tpu_custom_call.1} parent=5 // pred_check_branch
        %232 = sbr.rel (%p230) target = $region36
      $region35: #{tpu_custom_call.1} parent=5 // pred_region
        // Predicated region
        $region37: #{tpu_custom_call.1} parent=35 // pred_check
          %p233 = pneg %p36
        $region38: #{tpu_custom_call.1} parent=35 // pred_check_branch
          %235 = sbr.rel (%p233) target = $region40
        $region39: #{tpu_custom_call.1} parent=35 // pred_region
          %p236 = scmp.lt.s32.totalorder %s16, 1
          %s237 = scalar_select %p236, %s16, 1
          %s238 = smul.addr %s237, 2
          %s239 = smul.addr %s238, 4
          %s240 = scalar_lea.vmem %s0, %s239
        $region40: #{tpu_custom_call.1} parent=35 // pred_fallthru
          _
        // Predicated region
        $region41: #{tpu_custom_call.1} parent=35 // pred_check
          %p241 = pneg %p62
        $region42: #{tpu_custom_call.1} parent=35 // pred_check_branch
          %243 = sbr.rel (%p241) target = $region44
        $region43: #{tpu_custom_call.1} parent=35 // pred_region
          %p244 = scmp.lt.s32.totalorder %s16, 1
          %s245 = scalar_select %p244, %s16, 1
          %s246 = smul.addr %s245, 2
          %s247 = smul.addr %s246, 4
          %s248 = scalar_lea.vmem %s1, %s247
        $region44: #{tpu_custom_call.1} parent=35 // pred_fallthru
          _
      $region36: #{tpu_custom_call.1} parent=5 // pred_fallthru
        _
      %p249 = scmp.le.s32.totalorder 1, %s16
      %p250 = scmp.lt.s32.totalorder %s16, 3
      %p251 = pnand %p249, %p250
      %p252 = pneg %p251
      // Predicated region
      $region45: #{tpu_custom_call.1} parent=5 // pred_check
        _
      $region46: #{tpu_custom_call.1} parent=5 // pred_check_branch
        %254 = sbr.rel (%p251) target = $region48
      $region47: #{tpu_custom_call.1} parent=5 // pred_region
        %s255 = ssub.s32 %s16, 1
        %p256 = scmp.lt.s32.totalorder %s21, 1
        %s257 = scalar_select %p256, %s21, 1
        %s258 = smul.addr %s257, 2
        %s259 = smul.addr %s258, 4
        %s260 = scalar_lea.vmem %s0, %s259
        %p261 = pneg %p42
        %p262 = pneg %p39
        %p263 = scmp.lt.s32.totalorder %s21, 1
        %s264 = scalar_select %p263, %s21, 1
        %s265 = smul.addr %s264, 2
        %s266 = smul.addr %s265, 4
        %s267 = scalar_lea.vmem %s1, %s266
        %p268 = pneg %p68
        %p269 = pneg %p65
        %p270 = pneg %p89
        %p271 = pneg %p86
        %p272 = pneg %p110
        %p273 = pneg %p107
        %p274 = pneg %p131
        %p275 = pneg %p128
        %p276 = pneg %p152
        %p277 = pneg %p149
        %p278 = pneg %p173
        %p279 = pneg %p170
        %p280 = pneg %p199
        %p281 = pneg %p196
        %s282 = sand.u32 %s186, 1
        %s283 = scalar_lea.sflag [#allocation3], %s282
        %s284 = sand.u32 %s186, 1
        %s285 = smul.addr %s284, 16
        %s286 = scalar_lea.vmem [#allocation2], %s285
        %p287 = scmp.lt.s32.totalorder %s21, 1
        %s288 = scalar_select %p287, %s21, 1
        %s289 = smul.addr %s288, 2
        %s290 = smul.addr %s289, 4
        %s291 = scalar_lea.vmem %s0, %s290
        %p292 = scmp.lt.s32.totalorder %s21, 1
        %s293 = scalar_select %p292, %s21, 1
        %s294 = smul.addr %s293, 2
        %s295 = smul.addr %s294, 4
        %s296 = scalar_lea.vmem %s1, %s295
        %v297 = vld [vmem:[%s2] sm:$0xff]
        %v298 = vld [vmem:[%s3] sm:$0xff]
        %v299 = vld [vmem:[%s4] sm:$0xff]
        %v300 = vld [vmem:[%s5] sm:$0xff]
        %v301 = vld [vmem:[%s6] sm:$0xff]
        %v302 = vld [vmem:[%s291] sm:$0xff]
        %v303 = vld [vmem:[%s296] sm:$0xff]
        %305 = vst [vmem:[#allocation1] ss:$2 sm:$0xff] %v303
        %v306 = vld.sshfl [vmem:[#allocation1] sm:$0xff pattern:$0x75316420]
        %v307 = vld.sshfl [vmem:[#allocation1 + $0x8] sm:$0xff pattern:$0x75316420]
        %vm308 = vcmask 31744
        %v310 = vsel %vm308, %v298, 0
        %vm312 = vcmask 1043456
        %v313 = vsel %vm312, %v306, 0
        %v315 = vsel %vm312, %v307, 0
        %317 = vmatpush.msra.mxu0 0.0
        %318 = vmatpush.msra.mxu0 0.0
        %319 = vmatpush.msra.mxu0 0.0
        %320 = vmatpush.msra.mxu0 0.0
        %321 = vmatpush.msra.mxu0 0.0
        %322 = vmatpush.msra.mxu0 0.0
        %323 = vmatpush.msra.mxu0 0.0
        %324 = vmatpush.msra.mxu0 0.0
        %325 = vmatpush.msra.mxu0 0.0
        %326 = vmatpush.msra.mxu0 0.0
        %327 = vmatpush.msra.mxu0 0.0
        %328 = vmatpush.msra.mxu0 0.0
        %329 = vmatpush.msra.mxu0 0.0
        %330 = vmatpush.msra.mxu0 0.0
        %331 = vmatpush.msra.mxu0 0.0
        %332 = vmatpush.msra.mxu0 %v313
        %333 = vmatmul.f32.gmra.mxu0 %v310
        %v334 = vpop.f32.mrf.mxu0
        %v335 = vadd.f32 0.0, %v334
        %336 = vdwg.mxu0
        %337 = vmatpush.msra.mxu0 0.0
        %338 = vmatpush.msra.mxu0 0.0
        %339 = vmatpush.msra.mxu0 0.0
        %340 = vmatpush.msra.mxu0 0.0
        %341 = vmatpush.msra.mxu0 0.0
        %342 = vmatpush.msra.mxu0 0.0
        %343 = vmatpush.msra.mxu0 0.0
        %344 = vmatpush.msra.mxu0 0.0
        %345 = vmatpush.msra.mxu0 0.0
        %346 = vmatpush.msra.mxu0 0.0
        %347 = vmatpush.msra.mxu0 0.0
        %348 = vmatpush.msra.mxu0 0.0
        %349 = vmatpush.msra.mxu0 0.0
        %350 = vmatpush.msra.mxu0 0.0
        %351 = vmatpush.msra.mxu0 0.0
        %352 = vmatpush.msra.mxu0 %v315
        %353 = vmatmul.f32.gmra.mxu0 %v310
        %v354 = vpop.f32.mrf.mxu0
        %v355 = vadd.f32 0.0, %v354
        %356 = vdwg.mxu0
        %358 = vst [vmem:[#allocation1] ss:$2 sm:$0xff] %v302
        %v359 = vld.sshfl [vmem:[#allocation1] sm:$0xff pattern:$0x75316420]
        %v360 = vld.sshfl [vmem:[#allocation1 + $0x8] sm:$0xff pattern:$0x75316420]
        %v362 = vsel %vm308, %v297, 0
        %v364 = vsel %vm312, %v359, 0
        %v366 = vsel %vm312, %v360, 0
        %368 = vmatpush.msra.mxu0 0.0
        %369 = vmatpush.msra.mxu0 0.0
        %370 = vmatpush.msra.mxu0 0.0
        %371 = vmatpush.msra.mxu0 0.0
        %372 = vmatpush.msra.mxu0 0.0
        %373 = vmatpush.msra.mxu0 0.0
        %374 = vmatpush.msra.mxu0 0.0
        %375 = vmatpush.msra.mxu0 0.0
        %376 = vmatpush.msra.mxu0 0.0
        %377 = vmatpush.msra.mxu0 0.0
        %378 = vmatpush.msra.mxu0 0.0
        %379 = vmatpush.msra.mxu0 0.0
        %380 = vmatpush.msra.mxu0 0.0
        %381 = vmatpush.msra.mxu0 0.0
        %382 = vmatpush.msra.mxu0 0.0
        %383 = vmatpush.msra.mxu0 %v364
        %384 = vmatmul.f32.gmra.mxu0 %v362
        %v385 = vpop.f32.mrf.mxu0
        %v386 = vadd.f32 %v335, %v385
        %387 = vdwg.mxu0
        %388 = vmatpush.msra.mxu0 0.0
        %389 = vmatpush.msra.mxu0 0.0
        %390 = vmatpush.msra.mxu0 0.0
        %391 = vmatpush.msra.mxu0 0.0
        %392 = vmatpush.msra.mxu0 0.0
        %393 = vmatpush.msra.mxu0 0.0
        %394 = vmatpush.msra.mxu0 0.0
        %395 = vmatpush.msra.mxu0 0.0
        %396 = vmatpush.msra.mxu0 0.0
        %397 = vmatpush.msra.mxu0 0.0
        %398 = vmatpush.msra.mxu0 0.0
        %399 = vmatpush.msra.mxu0 0.0
        %400 = vmatpush.msra.mxu0 0.0
        %401 = vmatpush.msra.mxu0 0.0
        %402 = vmatpush.msra.mxu0 0.0
        %403 = vmatpush.msra.mxu0 %v366
        %404 = vmatmul.f32.gmra.mxu0 %v362
        %v405 = vpop.f32.mrf.mxu0
        %v406 = vadd.f32 %v355, %v405
        %407 = vdwg.mxu0
        %409 = vset.pattern.permute.xlu0 0
        %410 = vperm.xlu0 %409, %v299
        %v411 = vpop.permute.xlu0 %410
        %v413 = vadd.f32 %v386, %v411
        %v414 = vadd.f32 %v406, %v411
        %v415 = vmax.f32 %v413, 0.0
        %v416 = vmax.f32 %v414, 0.0
        %v417 = vadd.f32 %v415, %v416
        %418 = vadd.xlane.f32.xlu0 %v417
        %v419 = vpop.xlane.xlu0 %418
        %v420 = vrcp.pop 256.0
        %v421 = vmul.f32 256.0, %v420
        %v422 = vsub.f32 1.0, %v421
        %v423 = vmul.f32 %v420, %v422
        %v424 = vadd.f32 %v420, %v423
        %vm425 = vweird.f32 %v420
        %v426 = vsel %vm425, %v420, %v424
        %v427 = vmul.f32 %v419, %v426
        %v428 = vmul.f32 %v300, %v427
        %vm429 = vcmask 15360
        %v430 = vsel %vm429, %v428, 0.0
        %v431 = vrot.slane %v430, 4
        %v432 = vadd.f32 %v430, %v431
        %v433 = vrot.slane %v432, 2
        %v434 = vadd.f32 %v432, %v433
        %v435 = vrot.slane %v434, 1
        %v436 = vadd.f32 %v434, %v435
        %v437 = vmax.f32 %v436, 0.0
        %v438 = vmul.f32 %v301, %v437
        %v439 = vsel %vm429, %v438, 0.0
        %440 = vadd.xlane.f32.xlu0 %v439
        %v441 = vpop.xlane.xlu0 %440
        %v442 = vxor.u32 %v441, 2147483648
        %v443 = vmul.f32 %v442, 1.442695
        %v444 = vpow.pop %v443
        %v445 = vadd.f32 %v444, 1.0
        %v446 = vrcp.pop %v445
        %v447 = vmul.f32 %v445, %v446
        %v448 = vsub.f32 1.0, %v447
        %v449 = vmul.f32 %v446, %v448
        %v450 = vadd.f32 %v446, %v449
        %vm451 = vweird.f32 %v445
        %vm452 = vweird.f32 %v446
        %vm453 = vmor %vm451, %vm452
        %v454 = vsel %vm453, %v446, %v450
        %v455 = vand.u32 2147483647, %v445
        %vm456 = vcmp.eq.f32.partialorder %v455, 8.507059e+37
        %v457 = vand.u32 %v445, 2147483648
        %v458 = vor.u32 1.1754944e-38, %v457
        %v459 = vsel %vm456, %v458, %v454
        %v460 = vmul.f32 1.0, %v459
        %v461 = vadd.f32 %v460, 1.0
        %v462 = vmul.f32 %v415, %v461
        %v463 = vmul.f32 %v416, %v461
        %464 = vst [vmem:[%s286] sm:$0xff] %v462
        %465 = vst [vmem:[%s286 + $0x8] sm:$0xff] %v463
        %s466 = sand.u32 %s186, 1
        %s467 = scalar_lea.sflag [#allocation3], %s466
        %s468 = sand.u32 %s186, 1
        %s469 = smul.addr %s468, 16
        %s470 = scalar_lea.vmem [#allocation2], %s469
        // Predicated region
        $region49: #{tpu_custom_call.1} parent=47 // pred_check
          %p471 = pneg %p196
        $region50: #{tpu_custom_call.1} parent=47 // pred_check_branch
          %473 = sbr.rel (%p471) target = $region52
        $region51: #{tpu_custom_call.1} parent=47 // pred_region
          %475 = vsyncadd %s467, 0
          %s476 = smul.addr %s21, 2
          %s477 = smul.addr %s476, 8
          %s478 = scalar_lea.hbm %s7, %s477
          %s480 = sshll.u32 %s470, 4
          %s481 = int_to_ptr.vmem [resolvable:$true] %s480
          %s482 = sshll.u32 %s478, 4
          %s483 = int_to_ptr.hbm [resolvable:$true] %s482
          %485 = dma.vmem_to_hbm [thread:$0]  %s481, 256, %s483, %s467
        $region52: #{tpu_custom_call.1} parent=47 // pred_fallthru
          _
      $region48: #{tpu_custom_call.1} parent=5 // pred_fallthru
        _
      %p486 = scmp.le.s32.totalorder 2, %s16
      // Predicated region
      $region53: #{tpu_custom_call.1} parent=5 // pred_check
        %p487 = pneg %p486
      $region54: #{tpu_custom_call.1} parent=5 // pred_check_branch
        %489 = sbr.rel (%p487) target = $region56
      $region55: #{tpu_custom_call.1} parent=5 // pred_region
        %s490 = ssub.s32 %s16, 2
        // Predicated region
        $region57: #{tpu_custom_call.1} parent=55 // pred_check
          %p491 = pneg %p202
        $region58: #{tpu_custom_call.1} parent=55 // pred_check_branch
          %493 = sbr.rel (%p491) target = $region60
        $region59: #{tpu_custom_call.1} parent=55 // pred_region
          %s494 = sand.u32 %s187, 1
          %s495 = scalar_lea.sflag [#allocation3], %s494
          %s496 = sand.u32 %s187, 1
          %s497 = smul.addr %s496, 16
          %s498 = scalar_lea.vmem [#allocation2], %s497
          %500 = dma.done %s495, 256
        $region60: #{tpu_custom_call.1} parent=55 // pred_fallthru
          _
      $region56: #{tpu_custom_call.1} parent=5 // pred_fallthru
        _
    $region6: #{tpu_custom_call.1} parent=1 // loop_footer
      %s20 = sadd.s32 1, %s16
    $region7: #{tpu_custom_call.1} parent=1 // loop_footer_branch
      %15 = sbr.rel target = $region3
    $region8: #{tpu_custom_call.1} parent=1 // loop_exit
      _
    %501 = vsyncpa [#allocation3], 1
    %s502 = scalar_lea.sflag [#allocation3], 1
    %503 = vsyncpa %s502, 1

</llo_original>
